<compile_context>
chip_gen: v5e
topology: v5e:2x2
jax: 0.10.0
libtpu: 0.0.40
codegen_flags: <defaults>
</compile_context>

<pallas_src>
import jax
import jax.numpy as jnp
from jax.experimental import pallas as pl
from jax.experimental.pallas import tpu as pltpu

LANE = 128


def _round_up(v, m):
    return ((v + m - 1) // m) * m


def gru_linear_kernel(x_ref, wih_ref, whh_ref, bg_ref, bhn_ref,
                      wlin_ref, blin_ref, out_ref):
    # x_ref:    (S*B, F)   bf16 time-major flattened input (row t*B + b)
    # wih_ref:  (F, W)     bf16 input->hidden weights, gate g at cols [g*Gp, g*Gp+H)
    # whh_ref:  (Gp, W)    bf16 hidden->hidden weights (same column packing)
    # bg_ref:   (1, W)     f32 fused gate bias: [b_ir+b_hr | b_iz+b_hz | b_in]
    # bhn_ref:  (1, Gp)    f32 b_hn (stays inside the r* term, PyTorch semantics)
    # wlin_ref: (Gp, Op)   bf16 linear head weight
    # blin_ref: (1, Op)    f32 linear head bias
    # out_ref:  (1, B, Op) f32 linear(h_n), lane-dense padded output
    SB = x_ref.shape[0]
    Gp = whh_ref.shape[0]
    B = out_ref.shape[1]
    S = SB // B

    whh = whh_ref[...]                                   # resident bf16 (Gp, W)
    bhn_b = jnp.broadcast_to(bhn_ref[...], (B, Gp))      # hoisted broadcast

    def sigmoid(v):                                      # 1 EUP op (tanh), no exp+div
        return 0.5 * jnp.tanh(0.5 * v) + 0.5

    # Hoisted input projection: one MXU matmul for all S timesteps, OFF the
    # serial recurrence chain (bf16 operands, f32 accumulation).
    gi_all = (jnp.dot(x_ref[...], wih_ref[...],
                      preferred_element_type=jnp.float32) + bg_ref[...])   # (S*B, W)

    # ---- t = 0 peeled: h_0 == 0 => gh == 0, no recurrent matmul ----
    gi = gi_all[0:B, :]
    rz = sigmoid(gi[:, :2 * Gp])
    r, z = rz[:, :Gp], rz[:, Gp:]
    n = jnp.tanh(gi[:, 2 * Gp:3 * Gp] + r * bhn_b)
    h = (1.0 - z) * n                                    # (B, Gp) f32

    # ---- t = 1 .. S-1, fully unrolled (S is small & static) ----
    # TODO(synk): for long sequences switch to lax.fori_loop(..., unroll=2-4)
    # with gi_all[pl.ds(pl.multiple_of(t*B, B), B)] and stream gi_all in S-chunks.
    for t in range(1, S):
        gi = gi_all[t * B:(t + 1) * B, :]                # sublane-aligned slice
        gh = jnp.dot(h.astype(whh.dtype), whh,
                     preferred_element_type=jnp.float32)             # (B, W) f32
        rz = sigmoid(gi[:, :2 * Gp] + gh[:, :2 * Gp])    # fused r/z activation
        r, z = rz[:, :Gp], rz[:, Gp:]
        n = jnp.tanh(gi[:, 2 * Gp:3 * Gp] + r * (gh[:, 2 * Gp:3 * Gp] + bhn_b))
        h = (1.0 - z) * n + z * h

    y = (jnp.dot(h.astype(wlin_ref.dtype), wlin_ref[...],
                 preferred_element_type=jnp.float32) + blin_ref[...])
    out_ref[0] = y.astype(out_ref.dtype)                 # lane-dense (unmasked) store


def gru_forward(x_bsf, w_ih, w_hh, b_ih, b_hh, w_lin, b_lin):
    """x_bsf: (B, S, F) batch-first input (PyTorch convention).
    w_ih: (3H, F), w_hh: (3H, H), b_ih/b_hh: (3H,)  (PyTorch GRU parameter layout)
    w_lin: (O, H), b_lin: (O,)
    Returns linear(h_n): (1, B, O).
    """
    B, S, F = x_bsf.shape
    H = w_hh.shape[1]
    O = w_lin.shape[0]

    # Gate packing: if all three gates fit in one 128-lane group (3H <= 128),
    # pack r|z|n contiguously (Gp = H); otherwise pad each gate to a 128-lane
    # boundary so every gate slice stays lane-aligned.
    Gp = H if 3 * H <= LANE else _round_up(H, LANE)
    W = _round_up(3 * Gp, LANE)
    Op = _round_up(O, LANE)              # lane-dense padded output

    f32, bf16 = jnp.float32, jnp.bfloat16

    # (B,S,F) -> time-major (S,B,F) -> flattened (S*B, F); row t*B + b <-> (t, b).
    x2d = jnp.transpose(x_bsf, (1, 0, 2)).reshape(S * B, F).astype(bf16)

    def pack_gates(w, rows):
        # (3H, rows) PyTorch layout -> (rows, W); gate g in cols [g*Gp, g*Gp+H).
        out = jnp.zeros((rows, W), f32)
        for g in range(3):
            out = out.at[:, g * Gp:g * Gp + H].set(w[g * H:(g + 1) * H, :].T.astype(f32))
        return out

    wih_p = pack_gates(w_ih, F).astype(bf16)                                    # (F, W)
    whh_p = jnp.zeros((Gp, W), f32).at[:H, :].set(pack_gates(w_hh, H)).astype(bf16)

    # Fold b_ih + b_hh for the r and z gates; keep b_hn separate (r* term).
    bg = jnp.zeros((1, W), f32)
    bg = bg.at[0, 0 * Gp:0 * Gp + H].set((b_ih[0:H] + b_hh[0:H]).astype(f32))
    bg = bg.at[0, 1 * Gp:1 * Gp + H].set((b_ih[H:2 * H] + b_hh[H:2 * H]).astype(f32))
    bg = bg.at[0, 2 * Gp:2 * Gp + H].set(b_ih[2 * H:3 * H].astype(f32))
    bhn = jnp.zeros((1, Gp), f32).at[0, :H].set(b_hh[2 * H:3 * H].astype(f32))

    wlin_p = jnp.zeros((Gp, Op), f32).at[:H, :O].set(w_lin.T.astype(f32)).astype(bf16)
    blin_p = jnp.zeros((1, Op), f32).at[0, :O].set(b_lin.astype(f32))

    # Generation-aware VMEM budget: sized to the resident set, capped at half of
    # this chip's physical VMEM, and never below the resident set itself.
    resident = (S * B * F * 2              # x (bf16)
                + S * B * W * 4            # hoisted gi_all (f32)
                + (F + Gp) * W * 2         # wih + whh (bf16)
                + Gp * Op * 2              # linear head weight (bf16)
                + (W + Gp + Op) * 4        # biases (f32)
                + B * Op * 4               # output
                + 8 * B * W * 4)           # per-step temporaries headroom
    try:
        vmem_cap = int(getattr(pltpu.get_tpu_info(), "vmem_capacity_bytes", 64 << 20))
    except Exception:
        vmem_cap = 64 << 20                # conservative (v7x per-TC size)
    vmem_budget = int(min(max(2 * resident, 4 << 20), vmem_cap // 2))
    vmem_budget = int(min(max(vmem_budget, resident + (1 << 20)), vmem_cap - (4 << 20)))

    vmem = pl.BlockSpec(memory_space=pltpu.MemorySpace.VMEM)
    out_padded = pl.pallas_call(
        gru_linear_kernel,
        out_shape=jax.ShapeDtypeStruct((1, B, Op), f32),
        in_specs=[vmem] * 7,
        out_specs=vmem,
        compiler_params=pltpu.CompilerParams(vmem_limit_bytes=vmem_budget),
    )(x2d, wih_p, whh_p, bg, bhn, wlin_p, blin_p)

    # TODO(synk): for production shapes, add a 'parallel' batch grid axis (uses
    # both v7x TensorCores) and stream gi_all from HBM in S-chunks instead of
    # holding it fully VMEM-resident.
    return out_padded[:, :, :O]


def gru_forward_ref(x_bsf, w_ih, w_hh, b_ih, b_hh, w_lin, b_lin):
    """Pure-JAX f32 reference (PyTorch GRU + Linear semantics) for validation."""
    B, S, F = x_bsf.shape
    H = w_hh.shape[1]
    h = jnp.zeros((B, H), jnp.float32)
    for t in range(S):
        x_t = x_bsf[:, t, :]
        gi = x_t @ w_ih.T + b_ih
        gh = h @ w_hh.T + b_hh
        i_r, i_z, i_n = gi[:, :H], gi[:, H:2 * H], gi[:, 2 * H:]
        h_r, h_z, h_n = gh[:, :H], gh[:, H:2 * H], gh[:, 2 * H:]
        r = jax.nn.sigmoid(i_r + h_r)
        z = jax.nn.sigmoid(i_z + h_z)
        n = jnp.tanh(i_n + r * h_n)
        h = (1.0 - z) * n + z * h
    return (h @ w_lin.T + b_lin)[None, :, :]


if __name__ == "__main__":
    # Small shapes consistent with the module's forward:
    # X: (batch, seq, n_feats), n_hidden hidden units, 1 layer, linear -> n_outputs
    B, S, F, H, O = 8, 8, 4, 32, 1

    key = jax.random.PRNGKey(0)
    kx, k1, k2, k3, k4, k5, k6 = jax.random.split(key, 7)

    x = jax.random.normal(kx, (B, S, F), dtype=jnp.float32)

    # Deterministic synthetic parameters (PyTorch GRU parameter shapes).
    scale = 1.0 / jnp.sqrt(H * 1.0)
    w_ih = jax.random.uniform(k1, (3 * H, F), minval=-scale, maxval=scale)
    w_hh = jax.random.uniform(k2, (3 * H, H), minval=-scale, maxval=scale)
    b_ih = jax.random.uniform(k3, (3 * H,), minval=-scale, maxval=scale)
    b_hh = jax.random.uniform(k4, (3 * H,), minval=-scale, maxval=scale)
    w_lin = jax.random.uniform(k5, (O, H), minval=-scale, maxval=scale)
    b_lin = jax.random.uniform(k6, (O,), minval=-scale, maxval=scale)

    out = gru_forward(x, w_ih, w_hh, b_ih, b_hh, w_lin, b_lin)
    out = jax.block_until_ready(out)

    ref = gru_forward_ref(x, w_ih, w_hh, b_ih, b_hh, w_lin, b_lin)
    assert out.shape == (1, B, O)
    # bf16 MXU operands (f32 accumulation) vs. the f32 reference -> relaxed tolerance.
    assert jnp.allclose(out, ref, atol=2e-2, rtol=2e-2), "mismatch vs reference"

    print("KERNEL_OK")
</pallas_src>

<mosaic_0001>
module attributes {stable_mosaic.version = 11 : i64} {
  func.func @gru_linear_kernel(%arg0: memref<64x4xbf16, #tpu.memory_space<vmem>>, %arg1: memref<4x128xbf16, #tpu.memory_space<vmem>>, %arg2: memref<32x128xbf16, #tpu.memory_space<vmem>>, %arg3: memref<1x128xf32, #tpu.memory_space<vmem>>, %arg4: memref<1x32xf32, #tpu.memory_space<vmem>>, %arg5: memref<32x128xbf16, #tpu.memory_space<vmem>>, %arg6: memref<1x128xf32, #tpu.memory_space<vmem>>, %arg7: memref<1x8x128xf32, #tpu.memory_space<vmem>>) attributes {dimension_semantics = [], scalar_prefetch = 0 : i64, scratch_operands = 0 : i64, tpu.core_type = #tpu.core_type<tc>} {
    %c0 = arith.constant 0 : index
    %c0_0 = arith.constant 0 : index
    %0 = vector.load %arg2[%c0, %c0_0] : memref<32x128xbf16, #tpu.memory_space<vmem>>, vector<32x128xbf16>
    %c0_1 = arith.constant 0 : index
    %c0_2 = arith.constant 0 : index
    %1 = vector.load %arg4[%c0_1, %c0_2] : memref<1x32xf32, #tpu.memory_space<vmem>>, vector<1x32xf32>
    %2 = vector.shape_cast %1 : vector<1x32xf32> to vector<1x32xf32>
    %3 = vector.broadcast %2 : vector<1x32xf32> to vector<8x32xf32>
    %c0_3 = arith.constant 0 : index
    %c0_4 = arith.constant 0 : index
    %4 = vector.load %arg0[%c0_3, %c0_4] : memref<64x4xbf16, #tpu.memory_space<vmem>>, vector<64x4xbf16>
    %c0_5 = arith.constant 0 : index
    %c0_6 = arith.constant 0 : index
    %5 = vector.load %arg1[%c0_5, %c0_6] : memref<4x128xbf16, #tpu.memory_space<vmem>>, vector<4x128xbf16>
    %cst = arith.constant dense<0.000000e+00> : vector<64x128xf32>
    %6 = tpu.matmul %4, %5, %cst {dimension_numbers = #tpu.dot_dimension_numbers<[1], [0], [0], [1], [0, 0, 1, 1], [], []>} : vector<64x4xbf16>, vector<4x128xbf16>, vector<64x128xf32> -> vector<64x128xf32>
    %c0_7 = arith.constant 0 : index
    %c0_8 = arith.constant 0 : index
    %7 = vector.load %arg3[%c0_7, %c0_8] : memref<1x128xf32, #tpu.memory_space<vmem>>, vector<1x128xf32>
    %8 = vector.broadcast %7 : vector<1x128xf32> to vector<64x128xf32>
    %9 = arith.addf %6, %8 : vector<64x128xf32>
    %10 = vector.extract_strided_slice %9 {offsets = [0, 0], sizes = [8, 128], strides = [1, 1]} : vector<64x128xf32> to vector<8x128xf32>
    %11 = vector.extract_strided_slice %10 {offsets = [0, 0], sizes = [8, 64], strides = [1, 1]} : vector<8x128xf32> to vector<8x64xf32>
    %cst_9 = arith.constant 5.000000e-01 : f32
    %12 = vector.broadcast %cst_9 : f32 to vector<8x64xf32>
    %13 = arith.mulf %12, %11 : vector<8x64xf32>
    %14 = math.tanh %13 : vector<8x64xf32>
    %cst_10 = arith.constant 5.000000e-01 : f32
    %15 = vector.broadcast %cst_10 : f32 to vector<8x64xf32>
    %16 = arith.mulf %15, %14 : vector<8x64xf32>
    %cst_11 = arith.constant 5.000000e-01 : f32
    %17 = vector.broadcast %cst_11 : f32 to vector<8x64xf32>
    %18 = arith.addf %16, %17 : vector<8x64xf32>
    %19 = vector.extract_strided_slice %18 {offsets = [0, 0], sizes = [8, 32], strides = [1, 1]} : vector<8x64xf32> to vector<8x32xf32>
    %20 = vector.extract_strided_slice %18 {offsets = [0, 32], sizes = [8, 32], strides = [1, 1]} : vector<8x64xf32> to vector<8x32xf32>
    %21 = vector.extract_strided_slice %10 {offsets = [0, 64], sizes = [8, 32], strides = [1, 1]} : vector<8x128xf32> to vector<8x32xf32>
    %22 = arith.mulf %19, %3 : vector<8x32xf32>
    %23 = arith.addf %21, %22 : vector<8x32xf32>
    %24 = math.tanh %23 : vector<8x32xf32>
    %cst_12 = arith.constant 1.000000e+00 : f32
    %25 = vector.broadcast %cst_12 : f32 to vector<8x32xf32>
    %26 = arith.subf %25, %20 : vector<8x32xf32>
    %27 = arith.mulf %26, %24 : vector<8x32xf32>
    %28 = vector.extract_strided_slice %9 {offsets = [8, 0], sizes = [8, 128], strides = [1, 1]} : vector<64x128xf32> to vector<8x128xf32>
    %29 = arith.truncf %27 : vector<8x32xf32> to vector<8x32xbf16>
    %cst_13 = arith.constant dense<0.000000e+00> : vector<8x128xf32>
    %30 = tpu.matmul %29, %0, %cst_13 {dimension_numbers = #tpu.dot_dimension_numbers<[1], [0], [0], [1], [0, 0, 1, 1], [], []>} : vector<8x32xbf16>, vector<32x128xbf16>, vector<8x128xf32> -> vector<8x128xf32>
    %31 = vector.extract_strided_slice %28 {offsets = [0, 0], sizes = [8, 64], strides = [1, 1]} : vector<8x128xf32> to vector<8x64xf32>
    %32 = vector.extract_strided_slice %30 {offsets = [0, 0], sizes = [8, 64], strides = [1, 1]} : vector<8x128xf32> to vector<8x64xf32>
    %33 = arith.addf %31, %32 : vector<8x64xf32>
    %cst_14 = arith.constant 5.000000e-01 : f32
    %34 = vector.broadcast %cst_14 : f32 to vector<8x64xf32>
    %35 = arith.mulf %34, %33 : vector<8x64xf32>
    %36 = math.tanh %35 : vector<8x64xf32>
    %cst_15 = arith.constant 5.000000e-01 : f32
    %37 = vector.broadcast %cst_15 : f32 to vector<8x64xf32>
    %38 = arith.mulf %37, %36 : vector<8x64xf32>
    %cst_16 = arith.constant 5.000000e-01 : f32
    %39 = vector.broadcast %cst_16 : f32 to vector<8x64xf32>
    %40 = arith.addf %38, %39 : vector<8x64xf32>
    %41 = vector.extract_strided_slice %40 {offsets = [0, 0], sizes = [8, 32], strides = [1, 1]} : vector<8x64xf32> to vector<8x32xf32>
    %42 = vector.extract_strided_slice %40 {offsets = [0, 32], sizes = [8, 32], strides = [1, 1]} : vector<8x64xf32> to vector<8x32xf32>
    %43 = vector.extract_strided_slice %28 {offsets = [0, 64], sizes = [8, 32], strides = [1, 1]} : vector<8x128xf32> to vector<8x32xf32>
    %44 = vector.extract_strided_slice %30 {offsets = [0, 64], sizes = [8, 32], strides = [1, 1]} : vector<8x128xf32> to vector<8x32xf32>
    %45 = arith.addf %44, %3 : vector<8x32xf32>
    %46 = arith.mulf %41, %45 : vector<8x32xf32>
    %47 = arith.addf %43, %46 : vector<8x32xf32>
    %48 = math.tanh %47 : vector<8x32xf32>
    %cst_17 = arith.constant 1.000000e+00 : f32
    %49 = vector.broadcast %cst_17 : f32 to vector<8x32xf32>
    %50 = arith.subf %49, %42 : vector<8x32xf32>
    %51 = arith.mulf %50, %48 : vector<8x32xf32>
    %52 = arith.mulf %42, %27 : vector<8x32xf32>
    %53 = arith.addf %51, %52 : vector<8x32xf32>
    %54 = vector.extract_strided_slice %9 {offsets = [16, 0], sizes = [8, 128], strides = [1, 1]} : vector<64x128xf32> to vector<8x128xf32>
    %55 = arith.truncf %53 : vector<8x32xf32> to vector<8x32xbf16>
    %cst_18 = arith.constant dense<0.000000e+00> : vector<8x128xf32>
    %56 = tpu.matmul %55, %0, %cst_18 {dimension_numbers = #tpu.dot_dimension_numbers<[1], [0], [0], [1], [0, 0, 1, 1], [], []>} : vector<8x32xbf16>, vector<32x128xbf16>, vector<8x128xf32> -> vector<8x128xf32>
    %57 = vector.extract_strided_slice %54 {offsets = [0, 0], sizes = [8, 64], strides = [1, 1]} : vector<8x128xf32> to vector<8x64xf32>
    %58 = vector.extract_strided_slice %56 {offsets = [0, 0], sizes = [8, 64], strides = [1, 1]} : vector<8x128xf32> to vector<8x64xf32>
    %59 = arith.addf %57, %58 : vector<8x64xf32>
    %cst_19 = arith.constant 5.000000e-01 : f32
    %60 = vector.broadcast %cst_19 : f32 to vector<8x64xf32>
    %61 = arith.mulf %60, %59 : vector<8x64xf32>
    %62 = math.tanh %61 : vector<8x64xf32>
    %cst_20 = arith.constant 5.000000e-01 : f32
    %63 = vector.broadcast %cst_20 : f32 to vector<8x64xf32>
    %64 = arith.mulf %63, %62 : vector<8x64xf32>
    %cst_21 = arith.constant 5.000000e-01 : f32
    %65 = vector.broadcast %cst_21 : f32 to vector<8x64xf32>
    %66 = arith.addf %64, %65 : vector<8x64xf32>
    %67 = vector.extract_strided_slice %66 {offsets = [0, 0], sizes = [8, 32], strides = [1, 1]} : vector<8x64xf32> to vector<8x32xf32>
    %68 = vector.extract_strided_slice %66 {offsets = [0, 32], sizes = [8, 32], strides = [1, 1]} : vector<8x64xf32> to vector<8x32xf32>
    %69 = vector.extract_strided_slice %54 {offsets = [0, 64], sizes = [8, 32], strides = [1, 1]} : vector<8x128xf32> to vector<8x32xf32>
    %70 = vector.extract_strided_slice %56 {offsets = [0, 64], sizes = [8, 32], strides = [1, 1]} : vector<8x128xf32> to vector<8x32xf32>
    %71 = arith.addf %70, %3 : vector<8x32xf32>
    %72 = arith.mulf %67, %71 : vector<8x32xf32>
    %73 = arith.addf %69, %72 : vector<8x32xf32>
    %74 = math.tanh %73 : vector<8x32xf32>
    %cst_22 = arith.constant 1.000000e+00 : f32
    %75 = vector.broadcast %cst_22 : f32 to vector<8x32xf32>
    %76 = arith.subf %75, %68 : vector<8x32xf32>
    %77 = arith.mulf %76, %74 : vector<8x32xf32>
    %78 = arith.mulf %68, %53 : vector<8x32xf32>
    %79 = arith.addf %77, %78 : vector<8x32xf32>
    %80 = vector.extract_strided_slice %9 {offsets = [24, 0], sizes = [8, 128], strides = [1, 1]} : vector<64x128xf32> to vector<8x128xf32>
    %81 = arith.truncf %79 : vector<8x32xf32> to vector<8x32xbf16>
    %cst_23 = arith.constant dense<0.000000e+00> : vector<8x128xf32>
    %82 = tpu.matmul %81, %0, %cst_23 {dimension_numbers = #tpu.dot_dimension_numbers<[1], [0], [0], [1], [0, 0, 1, 1], [], []>} : vector<8x32xbf16>, vector<32x128xbf16>, vector<8x128xf32> -> vector<8x128xf32>
    %83 = vector.extract_strided_slice %80 {offsets = [0, 0], sizes = [8, 64], strides = [1, 1]} : vector<8x128xf32> to vector<8x64xf32>
    %84 = vector.extract_strided_slice %82 {offsets = [0, 0], sizes = [8, 64], strides = [1, 1]} : vector<8x128xf32> to vector<8x64xf32>
    %85 = arith.addf %83, %84 : vector<8x64xf32>
    %cst_24 = arith.constant 5.000000e-01 : f32
    %86 = vector.broadcast %cst_24 : f32 to vector<8x64xf32>
    %87 = arith.mulf %86, %85 : vector<8x64xf32>
    %88 = math.tanh %87 : vector<8x64xf32>
    %cst_25 = arith.constant 5.000000e-01 : f32
    %89 = vector.broadcast %cst_25 : f32 to vector<8x64xf32>
    %90 = arith.mulf %89, %88 : vector<8x64xf32>
    %cst_26 = arith.constant 5.000000e-01 : f32
    %91 = vector.broadcast %cst_26 : f32 to vector<8x64xf32>
    %92 = arith.addf %90, %91 : vector<8x64xf32>
    %93 = vector.extract_strided_slice %92 {offsets = [0, 0], sizes = [8, 32], strides = [1, 1]} : vector<8x64xf32> to vector<8x32xf32>
    %94 = vector.extract_strided_slice %92 {offsets = [0, 32], sizes = [8, 32], strides = [1, 1]} : vector<8x64xf32> to vector<8x32xf32>
    %95 = vector.extract_strided_slice %80 {offsets = [0, 64], sizes = [8, 32], strides = [1, 1]} : vector<8x128xf32> to vector<8x32xf32>
    %96 = vector.extract_strided_slice %82 {offsets = [0, 64], sizes = [8, 32], strides = [1, 1]} : vector<8x128xf32> to vector<8x32xf32>
    %97 = arith.addf %96, %3 : vector<8x32xf32>
    %98 = arith.mulf %93, %97 : vector<8x32xf32>
    %99 = arith.addf %95, %98 : vector<8x32xf32>
    %100 = math.tanh %99 : vector<8x32xf32>
    %cst_27 = arith.constant 1.000000e+00 : f32
    %101 = vector.broadcast %cst_27 : f32 to vector<8x32xf32>
    %102 = arith.subf %101, %94 : vector<8x32xf32>
    %103 = arith.mulf %102, %100 : vector<8x32xf32>
    %104 = arith.mulf %94, %79 : vector<8x32xf32>
    %105 = arith.addf %103, %104 : vector<8x32xf32>
    %106 = vector.extract_strided_slice %9 {offsets = [32, 0], sizes = [8, 128], strides = [1, 1]} : vector<64x128xf32> to vector<8x128xf32>
    %107 = arith.truncf %105 : vector<8x32xf32> to vector<8x32xbf16>
    %cst_28 = arith.constant dense<0.000000e+00> : vector<8x128xf32>
    %108 = tpu.matmul %107, %0, %cst_28 {dimension_numbers = #tpu.dot_dimension_numbers<[1], [0], [0], [1], [0, 0, 1, 1], [], []>} : vector<8x32xbf16>, vector<32x128xbf16>, vector<8x128xf32> -> vector<8x128xf32>
    %109 = vector.extract_strided_slice %106 {offsets = [0, 0], sizes = [8, 64], strides = [1, 1]} : vector<8x128xf32> to vector<8x64xf32>
    %110 = vector.extract_strided_slice %108 {offsets = [0, 0], sizes = [8, 64], strides = [1, 1]} : vector<8x128xf32> to vector<8x64xf32>
    %111 = arith.addf %109, %110 : vector<8x64xf32>
    %cst_29 = arith.constant 5.000000e-01 : f32
    %112 = vector.broadcast %cst_29 : f32 to vector<8x64xf32>
    %113 = arith.mulf %112, %111 : vector<8x64xf32>
    %114 = math.tanh %113 : vector<8x64xf32>
    %cst_30 = arith.constant 5.000000e-01 : f32
    %115 = vector.broadcast %cst_30 : f32 to vector<8x64xf32>
    %116 = arith.mulf %115, %114 : vector<8x64xf32>
    %cst_31 = arith.constant 5.000000e-01 : f32
    %117 = vector.broadcast %cst_31 : f32 to vector<8x64xf32>
    %118 = arith.addf %116, %117 : vector<8x64xf32>
    %119 = vector.extract_strided_slice %118 {offsets = [0, 0], sizes = [8, 32], strides = [1, 1]} : vector<8x64xf32> to vector<8x32xf32>
    %120 = vector.extract_strided_slice %118 {offsets = [0, 32], sizes = [8, 32], strides = [1, 1]} : vector<8x64xf32> to vector<8x32xf32>
    %121 = vector.extract_strided_slice %106 {offsets = [0, 64], sizes = [8, 32], strides = [1, 1]} : vector<8x128xf32> to vector<8x32xf32>
    %122 = vector.extract_strided_slice %108 {offsets = [0, 64], sizes = [8, 32], strides = [1, 1]} : vector<8x128xf32> to vector<8x32xf32>
    %123 = arith.addf %122, %3 : vector<8x32xf32>
    %124 = arith.mulf %119, %123 : vector<8x32xf32>
    %125 = arith.addf %121, %124 : vector<8x32xf32>
    %126 = math.tanh %125 : vector<8x32xf32>
    %cst_32 = arith.constant 1.000000e+00 : f32
    %127 = vector.broadcast %cst_32 : f32 to vector<8x32xf32>
    %128 = arith.subf %127, %120 : vector<8x32xf32>
    %129 = arith.mulf %128, %126 : vector<8x32xf32>
    %130 = arith.mulf %120, %105 : vector<8x32xf32>
    %131 = arith.addf %129, %130 : vector<8x32xf32>
    %132 = vector.extract_strided_slice %9 {offsets = [40, 0], sizes = [8, 128], strides = [1, 1]} : vector<64x128xf32> to vector<8x128xf32>
    %133 = arith.truncf %131 : vector<8x32xf32> to vector<8x32xbf16>
    %cst_33 = arith.constant dense<0.000000e+00> : vector<8x128xf32>
    %134 = tpu.matmul %133, %0, %cst_33 {dimension_numbers = #tpu.dot_dimension_numbers<[1], [0], [0], [1], [0, 0, 1, 1], [], []>} : vector<8x32xbf16>, vector<32x128xbf16>, vector<8x128xf32> -> vector<8x128xf32>
    %135 = vector.extract_strided_slice %132 {offsets = [0, 0], sizes = [8, 64], strides = [1, 1]} : vector<8x128xf32> to vector<8x64xf32>
    %136 = vector.extract_strided_slice %134 {offsets = [0, 0], sizes = [8, 64], strides = [1, 1]} : vector<8x128xf32> to vector<8x64xf32>
    %137 = arith.addf %135, %136 : vector<8x64xf32>
    %cst_34 = arith.constant 5.000000e-01 : f32
    %138 = vector.broadcast %cst_34 : f32 to vector<8x64xf32>
    %139 = arith.mulf %138, %137 : vector<8x64xf32>
    %140 = math.tanh %139 : vector<8x64xf32>
    %cst_35 = arith.constant 5.000000e-01 : f32
    %141 = vector.broadcast %cst_35 : f32 to vector<8x64xf32>
    %142 = arith.mulf %141, %140 : vector<8x64xf32>
    %cst_36 = arith.constant 5.000000e-01 : f32
    %143 = vector.broadcast %cst_36 : f32 to vector<8x64xf32>
    %144 = arith.addf %142, %143 : vector<8x64xf32>
    %145 = vector.extract_strided_slice %144 {offsets = [0, 0], sizes = [8, 32], strides = [1, 1]} : vector<8x64xf32> to vector<8x32xf32>
    %146 = vector.extract_strided_slice %144 {offsets = [0, 32], sizes = [8, 32], strides = [1, 1]} : vector<8x64xf32> to vector<8x32xf32>
    %147 = vector.extract_strided_slice %132 {offsets = [0, 64], sizes = [8, 32], strides = [1, 1]} : vector<8x128xf32> to vector<8x32xf32>
    %148 = vector.extract_strided_slice %134 {offsets = [0, 64], sizes = [8, 32], strides = [1, 1]} : vector<8x128xf32> to vector<8x32xf32>
    %149 = arith.addf %148, %3 : vector<8x32xf32>
    %150 = arith.mulf %145, %149 : vector<8x32xf32>
    %151 = arith.addf %147, %150 : vector<8x32xf32>
    %152 = math.tanh %151 : vector<8x32xf32>
    %cst_37 = arith.constant 1.000000e+00 : f32
    %153 = vector.broadcast %cst_37 : f32 to vector<8x32xf32>
    %154 = arith.subf %153, %146 : vector<8x32xf32>
    %155 = arith.mulf %154, %152 : vector<8x32xf32>
    %156 = arith.mulf %146, %131 : vector<8x32xf32>
    %157 = arith.addf %155, %156 : vector<8x32xf32>
    %158 = vector.extract_strided_slice %9 {offsets = [48, 0], sizes = [8, 128], strides = [1, 1]} : vector<64x128xf32> to vector<8x128xf32>
    %159 = arith.truncf %157 : vector<8x32xf32> to vector<8x32xbf16>
    %cst_38 = arith.constant dense<0.000000e+00> : vector<8x128xf32>
    %160 = tpu.matmul %159, %0, %cst_38 {dimension_numbers = #tpu.dot_dimension_numbers<[1], [0], [0], [1], [0, 0, 1, 1], [], []>} : vector<8x32xbf16>, vector<32x128xbf16>, vector<8x128xf32> -> vector<8x128xf32>
    %161 = vector.extract_strided_slice %158 {offsets = [0, 0], sizes = [8, 64], strides = [1, 1]} : vector<8x128xf32> to vector<8x64xf32>
    %162 = vector.extract_strided_slice %160 {offsets = [0, 0], sizes = [8, 64], strides = [1, 1]} : vector<8x128xf32> to vector<8x64xf32>
    %163 = arith.addf %161, %162 : vector<8x64xf32>
    %cst_39 = arith.constant 5.000000e-01 : f32
    %164 = vector.broadcast %cst_39 : f32 to vector<8x64xf32>
    %165 = arith.mulf %164, %163 : vector<8x64xf32>
    %166 = math.tanh %165 : vector<8x64xf32>
    %cst_40 = arith.constant 5.000000e-01 : f32
    %167 = vector.broadcast %cst_40 : f32 to vector<8x64xf32>
    %168 = arith.mulf %167, %166 : vector<8x64xf32>
    %cst_41 = arith.constant 5.000000e-01 : f32
    %169 = vector.broadcast %cst_41 : f32 to vector<8x64xf32>
    %170 = arith.addf %168, %169 : vector<8x64xf32>
    %171 = vector.extract_strided_slice %170 {offsets = [0, 0], sizes = [8, 32], strides = [1, 1]} : vector<8x64xf32> to vector<8x32xf32>
    %172 = vector.extract_strided_slice %170 {offsets = [0, 32], sizes = [8, 32], strides = [1, 1]} : vector<8x64xf32> to vector<8x32xf32>
    %173 = vector.extract_strided_slice %158 {offsets = [0, 64], sizes = [8, 32], strides = [1, 1]} : vector<8x128xf32> to vector<8x32xf32>
    %174 = vector.extract_strided_slice %160 {offsets = [0, 64], sizes = [8, 32], strides = [1, 1]} : vector<8x128xf32> to vector<8x32xf32>
    %175 = arith.addf %174, %3 : vector<8x32xf32>
    %176 = arith.mulf %171, %175 : vector<8x32xf32>
    %177 = arith.addf %173, %176 : vector<8x32xf32>
    %178 = math.tanh %177 : vector<8x32xf32>
    %cst_42 = arith.constant 1.000000e+00 : f32
    %179 = vector.broadcast %cst_42 : f32 to vector<8x32xf32>
    %180 = arith.subf %179, %172 : vector<8x32xf32>
    %181 = arith.mulf %180, %178 : vector<8x32xf32>
    %182 = arith.mulf %172, %157 : vector<8x32xf32>
    %183 = arith.addf %181, %182 : vector<8x32xf32>
    %184 = vector.extract_strided_slice %9 {offsets = [56, 0], sizes = [8, 128], strides = [1, 1]} : vector<64x128xf32> to vector<8x128xf32>
    %185 = arith.truncf %183 : vector<8x32xf32> to vector<8x32xbf16>
    %cst_43 = arith.constant dense<0.000000e+00> : vector<8x128xf32>
    %186 = tpu.matmul %185, %0, %cst_43 {dimension_numbers = #tpu.dot_dimension_numbers<[1], [0], [0], [1], [0, 0, 1, 1], [], []>} : vector<8x32xbf16>, vector<32x128xbf16>, vector<8x128xf32> -> vector<8x128xf32>
    %187 = vector.extract_strided_slice %184 {offsets = [0, 0], sizes = [8, 64], strides = [1, 1]} : vector<8x128xf32> to vector<8x64xf32>
    %188 = vector.extract_strided_slice %186 {offsets = [0, 0], sizes = [8, 64], strides = [1, 1]} : vector<8x128xf32> to vector<8x64xf32>
    %189 = arith.addf %187, %188 : vector<8x64xf32>
    %cst_44 = arith.constant 5.000000e-01 : f32
    %190 = vector.broadcast %cst_44 : f32 to vector<8x64xf32>
    %191 = arith.mulf %190, %189 : vector<8x64xf32>
    %192 = math.tanh %191 : vector<8x64xf32>
    %cst_45 = arith.constant 5.000000e-01 : f32
    %193 = vector.broadcast %cst_45 : f32 to vector<8x64xf32>
    %194 = arith.mulf %193, %192 : vector<8x64xf32>
    %cst_46 = arith.constant 5.000000e-01 : f32
    %195 = vector.broadcast %cst_46 : f32 to vector<8x64xf32>
    %196 = arith.addf %194, %195 : vector<8x64xf32>
    %197 = vector.extract_strided_slice %196 {offsets = [0, 0], sizes = [8, 32], strides = [1, 1]} : vector<8x64xf32> to vector<8x32xf32>
    %198 = vector.extract_strided_slice %196 {offsets = [0, 32], sizes = [8, 32], strides = [1, 1]} : vector<8x64xf32> to vector<8x32xf32>
    %199 = vector.extract_strided_slice %184 {offsets = [0, 64], sizes = [8, 32], strides = [1, 1]} : vector<8x128xf32> to vector<8x32xf32>
    %200 = vector.extract_strided_slice %186 {offsets = [0, 64], sizes = [8, 32], strides = [1, 1]} : vector<8x128xf32> to vector<8x32xf32>
    %201 = arith.addf %200, %3 : vector<8x32xf32>
    %202 = arith.mulf %197, %201 : vector<8x32xf32>
    %203 = arith.addf %199, %202 : vector<8x32xf32>
    %204 = math.tanh %203 : vector<8x32xf32>
    %cst_47 = arith.constant 1.000000e+00 : f32
    %205 = vector.broadcast %cst_47 : f32 to vector<8x32xf32>
    %206 = arith.subf %205, %198 : vector<8x32xf32>
    %207 = arith.mulf %206, %204 : vector<8x32xf32>
    %208 = arith.mulf %198, %183 : vector<8x32xf32>
    %209 = arith.addf %207, %208 : vector<8x32xf32>
    %210 = arith.truncf %209 : vector<8x32xf32> to vector<8x32xbf16>
    %c0_48 = arith.constant 0 : index
    %c0_49 = arith.constant 0 : index
    %211 = vector.load %arg5[%c0_48, %c0_49] : memref<32x128xbf16, #tpu.memory_space<vmem>>, vector<32x128xbf16>
    %cst_50 = arith.constant dense<0.000000e+00> : vector<8x128xf32>
    %212 = tpu.matmul %210, %211, %cst_50 {dimension_numbers = #tpu.dot_dimension_numbers<[1], [0], [0], [1], [0, 0, 1, 1], [], []>} : vector<8x32xbf16>, vector<32x128xbf16>, vector<8x128xf32> -> vector<8x128xf32>
    %c0_51 = arith.constant 0 : index
    %c0_52 = arith.constant 0 : index
    %213 = vector.load %arg6[%c0_51, %c0_52] : memref<1x128xf32, #tpu.memory_space<vmem>>, vector<1x128xf32>
    %214 = vector.broadcast %213 : vector<1x128xf32> to vector<8x128xf32>
    %215 = arith.addf %212, %214 : vector<8x128xf32>
    %c0_53 = arith.constant 0 : index
    %c0_54 = arith.constant 0 : index
    %c0_55 = arith.constant 0 : index
    %216 = vector.load %arg7[%c0_53, %c0_54, %c0_55] : memref<1x8x128xf32, #tpu.memory_space<vmem>>, vector<1x8x128xf32>
    %217 = vector.shape_cast %216 : vector<1x8x128xf32> to vector<8x128xf32>
    %218 = vector.shape_cast %215 : vector<8x128xf32> to vector<1x8x128xf32>
    tpu.vector_store %arg7[%c0_53, %c0_54, %c0_55], %218 {strides = array<i32>} : memref<1x8x128xf32, #tpu.memory_space<vmem>>, vector<1x8x128xf32>,
    return
  }
}

</mosaic_0001>

<llo_original>
// kernel: tpu_custom_call.1
$region0: #{tpu_custom_call.1}
  #allocation0 [shape = 'u32[]', space=smem, size = 0x4, offset = 0x4, fixed_abs, tag = 'smem constant byte address 0x4 - core index']
  #allocation1 [shape = 'u32[72,128]{1,0:T(1,128)}', space=vmem, size = 0x9000, scoped, tag = 'internal scratch']
  %s0 = inlined_call_operand.vmem [shape: bf16[64,4], index: 0, kind: input, shape index: {}]
  %s1 = inlined_call_operand.vmem [shape: bf16[4,128], index: 1, kind: input, shape index: {}]
  %s2 = inlined_call_operand.vmem [shape: bf16[32,128], index: 2, kind: input, shape index: {}]
  %s3 = inlined_call_operand.vmem [shape: f32[1,128], index: 3, kind: input, shape index: {}]
  %s4 = inlined_call_operand.vmem [shape: f32[1,32], index: 4, kind: input, shape index: {}]
  %s5 = inlined_call_operand.vmem [shape: bf16[32,128], index: 5, kind: input, shape index: {}]
  %s6 = inlined_call_operand.vmem [shape: f32[1,128], index: 6, kind: input, shape index: {}]
  %s7 = inlined_call_operand.hbm [shape: f32[1,8,128], index: 7, kind: output, shape index: {}]
  %s8 = sld [smem:[#allocation0]]
  $region38: #{tpu_custom_call.1} parent=0
    _
  %s10 = ssub.s32 1, %s8
  %s11 = scalar_select 0, %s10, %s8
  $region1: #{tpu_custom_call.1} parent=0
    #allocation2 [shape = 'u8[4096]{0}', space=vmem, size = 0x1000, scoped, tag = 'output window, operand 0, single buffered']
    #allocation3 [shape = 's32[1]{0}', space=sflag, size = 0x4, scoped, tag = 'scoped memory for tpu_custom_call.1']
    %12 = vsyncpa [#allocation3], 0
    // Predicated region
    $region2: #{tpu_custom_call.1} parent=1 // pred_check
      _
    $region3: #{tpu_custom_call.1} parent=1 // pred_check_branch
      %14 = sbr.rel (0) target = $region5
    $region4: #{tpu_custom_call.1} parent=1 // pred_region
      _
    $region5: #{tpu_custom_call.1} parent=1 // pred_fallthru
      _
    // Predicated region
    $region6: #{tpu_custom_call.1} parent=1 // pred_check
      _
    $region7: #{tpu_custom_call.1} parent=1 // pred_check_branch
      %16 = sbr.rel (0) target = $region9
    $region8: #{tpu_custom_call.1} parent=1 // pred_region
      _
    $region9: #{tpu_custom_call.1} parent=1 // pred_fallthru
      _
    // Predicated region
    $region10: #{tpu_custom_call.1} parent=1 // pred_check
      _
    $region11: #{tpu_custom_call.1} parent=1 // pred_check_branch
      %18 = sbr.rel (0) target = $region13
    $region12: #{tpu_custom_call.1} parent=1 // pred_region
      _
    $region13: #{tpu_custom_call.1} parent=1 // pred_fallthru
      _
    // Predicated region
    $region14: #{tpu_custom_call.1} parent=1 // pred_check
      _
    $region15: #{tpu_custom_call.1} parent=1 // pred_check_branch
      %20 = sbr.rel (0) target = $region17
    $region16: #{tpu_custom_call.1} parent=1 // pred_region
      _
    $region17: #{tpu_custom_call.1} parent=1 // pred_fallthru
      _
    // Predicated region
    $region18: #{tpu_custom_call.1} parent=1 // pred_check
      _
    $region19: #{tpu_custom_call.1} parent=1 // pred_check_branch
      %22 = sbr.rel (0) target = $region21
    $region20: #{tpu_custom_call.1} parent=1 // pred_region
      _
    $region21: #{tpu_custom_call.1} parent=1 // pred_fallthru
      _
    // Predicated region
    $region22: #{tpu_custom_call.1} parent=1 // pred_check
      _
    $region23: #{tpu_custom_call.1} parent=1 // pred_check_branch
      %24 = sbr.rel (0) target = $region25
    $region24: #{tpu_custom_call.1} parent=1 // pred_region
      _
    $region25: #{tpu_custom_call.1} parent=1 // pred_fallthru
      _
    // Predicated region
    $region26: #{tpu_custom_call.1} parent=1 // pred_check
      _
    $region27: #{tpu_custom_call.1} parent=1 // pred_check_branch
      %26 = sbr.rel (0) target = $region29
    $region28: #{tpu_custom_call.1} parent=1 // pred_region
      _
    $region29: #{tpu_custom_call.1} parent=1 // pred_fallthru
      _
    %v28 = vld [vmem:[%s2] sm:$0xf]
    %v29 = vld [vmem:[%s2 + $0x4] sm:$0xf]
    %v30 = vld [vmem:[%s2 + $0x8] sm:$0xf]
    %v31 = vld [vmem:[%s2 + $0xc] sm:$0xf]
    %v32 = vld [vmem:[%s4] sm:$0x1]
    %v34 = vperm.slane %v32, 0
    %v36 = vld [vmem:[%s0] sm:$0xf]
    %v37 = vld [vmem:[%s0 + $0x4] sm:$0xf]
    %v38 = vld [vmem:[%s0 + $0x8] sm:$0xf]
    %v39 = vld [vmem:[%s0 + $0xc] sm:$0xf]
    %v40 = vld [vmem:[%s0 + $0x10] sm:$0xf]
    %v41 = vld [vmem:[%s0 + $0x14] sm:$0xf]
    %v42 = vld [vmem:[%s0 + $0x18] sm:$0xf]
    %v43 = vld [vmem:[%s0 + $0x1c] sm:$0xf]
    %v44 = vld [vmem:[%s1] sm:$0x3]
    %v45 = vld [vmem:[%s3] sm:$0x1]
    %v47 = vperm.slane %v45, 0
    %v57 = vunpack.c.l.b16 %v36
    %v58 = vunpack.c.l.b16 %v37
    %v59 = vunpack.c.l.b16 %v38
    %v60 = vunpack.c.l.b16 %v39
    %v61 = vunpack.c.l.b16 %v40
    %v62 = vunpack.c.l.b16 %v41
    %v63 = vunpack.c.l.b16 %v42
    %v64 = vunpack.c.l.b16 %v43
    %v65 = vpack.c.b16 %v58, %v57
    %v66 = vpack.c.b16 %v60, %v59
    %v67 = vpack.c.b16 %v62, %v61
    %v68 = vpack.c.b16 %v64, %v63
    %vm69 = vcmask 31744
    %v71 = vsel %vm69, %v65, 0
    %v74 = vsel %vm69, %v66, 0
    %v77 = vsel %vm69, %v67, 0
    %v80 = vsel %vm69, %v68, 0
    %vm82 = vcmask 1041408
    %v84 = vsel %vm82, %v44, 0
    %86 = vmatpush.bf16.msra.mxu0 0
    %87 = vmatpush.bf16.msra.mxu0 0
    %88 = vmatpush.bf16.msra.mxu0 0
    %89 = vmatpush.bf16.msra.mxu0 0
    %90 = vmatpush.bf16.msra.mxu0 0
    %91 = vmatpush.bf16.msra.mxu0 0
    %92 = vmatpush.bf16.msra.mxu0 0
    %93 = vmatpush.bf16.msra.mxu0 %v84
    %94 = vmatmul.bf16.gmra.mxu0 %v71
    %v95 = vpop.f32.mrf.mxu0
    %v96 = vadd.f32 %v47, %v95
    %v97 = vpop.f32.mrf.mxu0
    %v98 = vadd.f32 %v47, %v97
    %99 = vmatmul.bf16.gmra.mxu0 %v74
    %v100 = vpop.f32.mrf.mxu0
    %v101 = vadd.f32 %v47, %v100
    %v102 = vpop.f32.mrf.mxu0
    %v103 = vadd.f32 %v47, %v102
    %104 = vmatmul.bf16.gmra.mxu0 %v77
    %v105 = vpop.f32.mrf.mxu0
    %v106 = vadd.f32 %v47, %v105
    %v107 = vpop.f32.mrf.mxu0
    %v108 = vadd.f32 %v47, %v107
    %109 = vmatmul.bf16.gmra.mxu0 %v80
    %v110 = vpop.f32.mrf.mxu0
    %v111 = vadd.f32 %v47, %v110
    %v112 = vpop.f32.mrf.mxu0
    %v113 = vadd.f32 %v47, %v112
    %114 = vdwg.mxu0
    %v115 = vmul.f32 %v96, 0.5
    %v116 = vtanh.pop %v115
    %v117 = vmul.f32 %v116, 0.5
    %v118 = vadd.f32 %v117, 0.5
    %v119 = vmul.f32 %v118, %v34
    %121 = vrot.lane.b32.xlu0 %v119, 64
    %v122 = vpop.permute.xlu0 %121
    %v124 = vadd.f32 %v96, %v122
    %v125 = vtanh.pop %v124
    %v126 = vsub.f32 1.0, %v118
    %128 = vrot.lane.b32.xlu0 %v125, 96
    %v129 = vpop.permute.xlu0 %128
    %v131 = vmul.f32 %v126, %v129
    %v132 = vpack.c.bf16 %v131, %v131
    %134 = vrot.lane.b32.xlu0 %v132, 96
    %v135 = vpop.permute.xlu0 %134
    %v140 = vunpack.c.l.b16 %v28
    %v141 = vunpack.c.l.b16 %v29
    %v142 = vunpack.c.l.b16 %v30
    %v143 = vunpack.c.l.b16 %v31
    %v144 = vpack.c.b16 %v141, %v140
    %v145 = vpack.c.b16 %v143, %v142
    %vm148 = vcmask 261120
    %v150 = vsel %vm148, %v135, 0
    %152 = vmatpush.bf16.msra.mxu0 0
    %153 = vmatpush.bf16.msra.mxu0 0
    %154 = vmatpush.bf16.msra.mxu0 0
    %155 = vmatpush.bf16.msra.mxu0 0
    %156 = vmatpush.bf16.msra.mxu0 0
    %157 = vmatpush.bf16.msra.mxu0 0
    %158 = vmatpush.bf16.msra.mxu0 %v145
    %159 = vmatpush.bf16.msra.mxu0 %v144
    %160 = vmatmul.bf16.gmra.mxu0 %v150
    %v161 = vpop.f32.mrf.mxu0
    %v162 = vadd.f32 0.0, %v161
    %v163 = vpop.f32.mrf.mxu0
    %164 = vdwg.mxu0
    %v165 = vadd.f32 %v98, %v162
    %v166 = vmul.f32 %v165, 0.5
    %v167 = vtanh.pop %v166
    %v168 = vmul.f32 %v167, 0.5
    %v169 = vadd.f32 %v168, 0.5
    %170 = vrot.lane.b32.xlu0 %v34, 64
    %v171 = vpop.permute.xlu0 %170
    %v173 = vadd.f32 %v162, %v171
    %175 = vrot.lane.b32.xlu0 %v173, 64
    %v176 = vpop.permute.xlu0 %175
    %v178 = vmul.f32 %v169, %v176
    %180 = vrot.lane.b32.xlu0 %v178, 64
    %v181 = vpop.permute.xlu0 %180
    %v183 = vadd.f32 %v98, %v181
    %v184 = vtanh.pop %v183
    %v185 = vsub.f32 1.0, %v169
    %187 = vrot.lane.b32.xlu0 %v184, 96
    %v188 = vpop.permute.xlu0 %187
    %v190 = vmul.f32 %v185, %v188
    %v191 = vmul.f32 %v169, %v131
    %v192 = vadd.f32 %v190, %v191
    %v193 = vpack.c.bf16 %v192, %v192
    %195 = vrot.lane.b32.xlu0 %v193, 96
    %v196 = vpop.permute.xlu0 %195
    %v198 = vsel %vm148, %v196, 0
    %200 = vmatpush.bf16.msra.mxu0 0
    %201 = vmatpush.bf16.msra.mxu0 0
    %202 = vmatpush.bf16.msra.mxu0 0
    %203 = vmatpush.bf16.msra.mxu0 0
    %204 = vmatpush.bf16.msra.mxu0 0
    %205 = vmatpush.bf16.msra.mxu0 0
    %206 = vmatpush.bf16.msra.mxu0 %v145
    %207 = vmatpush.bf16.msra.mxu0 %v144
    %208 = vmatmul.bf16.gmra.mxu0 %v198
    %v209 = vpop.f32.mrf.mxu0
    %v210 = vadd.f32 0.0, %v209
    %v211 = vpop.f32.mrf.mxu0
    %212 = vdwg.mxu0
    %v213 = vadd.f32 %v101, %v210
    %v214 = vmul.f32 %v213, 0.5
    %v215 = vtanh.pop %v214
    %v216 = vmul.f32 %v215, 0.5
    %v217 = vadd.f32 %v216, 0.5
    %v218 = vadd.f32 %v210, %v171
    %220 = vrot.lane.b32.xlu0 %v218, 64
    %v221 = vpop.permute.xlu0 %220
    %v223 = vmul.f32 %v217, %v221
    %225 = vrot.lane.b32.xlu0 %v223, 64
    %v226 = vpop.permute.xlu0 %225
    %v228 = vadd.f32 %v101, %v226
    %v229 = vtanh.pop %v228
    %v230 = vsub.f32 1.0, %v217
    %232 = vrot.lane.b32.xlu0 %v229, 96
    %v233 = vpop.permute.xlu0 %232
    %v235 = vmul.f32 %v230, %v233
    %v236 = vmul.f32 %v217, %v192
    %v237 = vadd.f32 %v235, %v236
    %v238 = vpack.c.bf16 %v237, %v237
    %240 = vrot.lane.b32.xlu0 %v238, 96
    %v241 = vpop.permute.xlu0 %240
    %v243 = vsel %vm148, %v241, 0
    %245 = vmatpush.bf16.msra.mxu0 0
    %246 = vmatpush.bf16.msra.mxu0 0
    %247 = vmatpush.bf16.msra.mxu0 0
    %248 = vmatpush.bf16.msra.mxu0 0
    %249 = vmatpush.bf16.msra.mxu0 0
    %250 = vmatpush.bf16.msra.mxu0 0
    %251 = vmatpush.bf16.msra.mxu0 %v145
    %252 = vmatpush.bf16.msra.mxu0 %v144
    %253 = vmatmul.bf16.gmra.mxu0 %v243
    %v254 = vpop.f32.mrf.mxu0
    %v255 = vadd.f32 0.0, %v254
    %v256 = vpop.f32.mrf.mxu0
    %257 = vdwg.mxu0
    %v258 = vadd.f32 %v103, %v255
    %v259 = vmul.f32 %v258, 0.5
    %v260 = vtanh.pop %v259
    %v261 = vmul.f32 %v260, 0.5
    %v262 = vadd.f32 %v261, 0.5
    %v263 = vadd.f32 %v255, %v171
    %265 = vrot.lane.b32.xlu0 %v263, 64
    %v266 = vpop.permute.xlu0 %265
    %v268 = vmul.f32 %v262, %v266
    %270 = vrot.lane.b32.xlu0 %v268, 64
    %v271 = vpop.permute.xlu0 %270
    %v273 = vadd.f32 %v103, %v271
    %v274 = vtanh.pop %v273
    %v275 = vsub.f32 1.0, %v262
    %277 = vrot.lane.b32.xlu0 %v274, 96
    %v278 = vpop.permute.xlu0 %277
    %v280 = vmul.f32 %v275, %v278
    %v281 = vmul.f32 %v262, %v237
    %v282 = vadd.f32 %v280, %v281
    %v283 = vpack.c.bf16 %v282, %v282
    %285 = vrot.lane.b32.xlu0 %v283, 96
    %v286 = vpop.permute.xlu0 %285
    %v288 = vsel %vm148, %v286, 0
    %290 = vmatpush.bf16.msra.mxu0 0
    %291 = vmatpush.bf16.msra.mxu0 0
    %292 = vmatpush.bf16.msra.mxu0 0
    %293 = vmatpush.bf16.msra.mxu0 0
    %294 = vmatpush.bf16.msra.mxu0 0
    %295 = vmatpush.bf16.msra.mxu0 0
    %296 = vmatpush.bf16.msra.mxu0 %v145
    %297 = vmatpush.bf16.msra.mxu0 %v144
    %298 = vmatmul.bf16.gmra.mxu0 %v288
    %v299 = vpop.f32.mrf.mxu0
    %v300 = vadd.f32 0.0, %v299
    %v301 = vpop.f32.mrf.mxu0
    %302 = vdwg.mxu0
    %v303 = vadd.f32 %v106, %v300
    %v304 = vmul.f32 %v303, 0.5
    %v305 = vtanh.pop %v304
    %v306 = vmul.f32 %v305, 0.5
    %v307 = vadd.f32 %v306, 0.5
    %v308 = vadd.f32 %v300, %v171
    %310 = vrot.lane.b32.xlu0 %v308, 64
    %v311 = vpop.permute.xlu0 %310
    %v313 = vmul.f32 %v307, %v311
    %315 = vrot.lane.b32.xlu0 %v313, 64
    %v316 = vpop.permute.xlu0 %315
    %v318 = vadd.f32 %v106, %v316
    %v319 = vtanh.pop %v318
    %v320 = vsub.f32 1.0, %v307
    %322 = vrot.lane.b32.xlu0 %v319, 96
    %v323 = vpop.permute.xlu0 %322
    %v325 = vmul.f32 %v320, %v323
    %v326 = vmul.f32 %v307, %v282
    %v327 = vadd.f32 %v325, %v326
    %v328 = vpack.c.bf16 %v327, %v327
    %330 = vrot.lane.b32.xlu0 %v328, 96
    %v331 = vpop.permute.xlu0 %330
    %v333 = vsel %vm148, %v331, 0
    %335 = vmatpush.bf16.msra.mxu0 0
    %336 = vmatpush.bf16.msra.mxu0 0
    %337 = vmatpush.bf16.msra.mxu0 0
    %338 = vmatpush.bf16.msra.mxu0 0
    %339 = vmatpush.bf16.msra.mxu0 0
    %340 = vmatpush.bf16.msra.mxu0 0
    %341 = vmatpush.bf16.msra.mxu0 %v145
    %342 = vmatpush.bf16.msra.mxu0 %v144
    %343 = vmatmul.bf16.gmra.mxu0 %v333
    %v344 = vpop.f32.mrf.mxu0
    %v345 = vadd.f32 0.0, %v344
    %v346 = vpop.f32.mrf.mxu0
    %347 = vdwg.mxu0
    %v348 = vadd.f32 %v108, %v345
    %v349 = vmul.f32 %v348, 0.5
    %v350 = vtanh.pop %v349
    %v351 = vmul.f32 %v350, 0.5
    %v352 = vadd.f32 %v351, 0.5
    %v353 = vadd.f32 %v345, %v171
    %355 = vrot.lane.b32.xlu0 %v353, 64
    %v356 = vpop.permute.xlu0 %355
    %v358 = vmul.f32 %v352, %v356
    %360 = vrot.lane.b32.xlu0 %v358, 64
    %v361 = vpop.permute.xlu0 %360
    %v363 = vadd.f32 %v108, %v361
    %v364 = vtanh.pop %v363
    %v365 = vsub.f32 1.0, %v352
    %367 = vrot.lane.b32.xlu0 %v364, 96
    %v368 = vpop.permute.xlu0 %367
    %v370 = vmul.f32 %v365, %v368
    %v371 = vmul.f32 %v352, %v327
    %v372 = vadd.f32 %v370, %v371
    %v373 = vpack.c.bf16 %v372, %v372
    %375 = vrot.lane.b32.xlu0 %v373, 96
    %v376 = vpop.permute.xlu0 %375
    %v378 = vsel %vm148, %v376, 0
    %380 = vmatpush.bf16.msra.mxu0 0
    %381 = vmatpush.bf16.msra.mxu0 0
    %382 = vmatpush.bf16.msra.mxu0 0
    %383 = vmatpush.bf16.msra.mxu0 0
    %384 = vmatpush.bf16.msra.mxu0 0
    %385 = vmatpush.bf16.msra.mxu0 0
    %386 = vmatpush.bf16.msra.mxu0 %v145
    %387 = vmatpush.bf16.msra.mxu0 %v144
    %388 = vmatmul.bf16.gmra.mxu0 %v378
    %v389 = vpop.f32.mrf.mxu0
    %v390 = vadd.f32 0.0, %v389
    %v391 = vpop.f32.mrf.mxu0
    %392 = vdwg.mxu0
    %v393 = vadd.f32 %v111, %v390
    %v394 = vmul.f32 %v393, 0.5
    %v395 = vtanh.pop %v394
    %v396 = vmul.f32 %v395, 0.5
    %v397 = vadd.f32 %v396, 0.5
    %v398 = vadd.f32 %v390, %v171
    %400 = vrot.lane.b32.xlu0 %v398, 64
    %v401 = vpop.permute.xlu0 %400
    %v403 = vmul.f32 %v397, %v401
    %405 = vrot.lane.b32.xlu0 %v403, 64
    %v406 = vpop.permute.xlu0 %405
    %v408 = vadd.f32 %v111, %v406
    %v409 = vtanh.pop %v408
    %v410 = vsub.f32 1.0, %v397
    %412 = vrot.lane.b32.xlu0 %v409, 96
    %v413 = vpop.permute.xlu0 %412
    %v415 = vmul.f32 %v410, %v413
    %v416 = vmul.f32 %v397, %v372
    %v417 = vadd.f32 %v415, %v416
    %v418 = vpack.c.bf16 %v417, %v417
    %420 = vrot.lane.b32.xlu0 %v418, 96
    %v421 = vpop.permute.xlu0 %420
    %v423 = vsel %vm148, %v421, 0
    %425 = vmatpush.bf16.msra.mxu0 0
    %426 = vmatpush.bf16.msra.mxu0 0
    %427 = vmatpush.bf16.msra.mxu0 0
    %428 = vmatpush.bf16.msra.mxu0 0
    %429 = vmatpush.bf16.msra.mxu0 0
    %430 = vmatpush.bf16.msra.mxu0 0
    %431 = vmatpush.bf16.msra.mxu0 %v145
    %432 = vmatpush.bf16.msra.mxu0 %v144
    %433 = vmatmul.bf16.gmra.mxu0 %v423
    %v434 = vpop.f32.mrf.mxu0
    %v435 = vadd.f32 0.0, %v434
    %v436 = vpop.f32.mrf.mxu0
    %437 = vdwg.mxu0
    %v438 = vadd.f32 %v113, %v435
    %v439 = vmul.f32 %v438, 0.5
    %v440 = vtanh.pop %v439
    %v441 = vmul.f32 %v440, 0.5
    %v442 = vadd.f32 %v441, 0.5
    %v443 = vadd.f32 %v435, %v171
    %445 = vrot.lane.b32.xlu0 %v443, 64
    %v446 = vpop.permute.xlu0 %445
    %v448 = vmul.f32 %v442, %v446
    %450 = vrot.lane.b32.xlu0 %v448, 64
    %v451 = vpop.permute.xlu0 %450
    %v453 = vadd.f32 %v113, %v451
    %v454 = vtanh.pop %v453
    %v455 = vsub.f32 1.0, %v442
    %457 = vrot.lane.b32.xlu0 %v454, 96
    %v458 = vpop.permute.xlu0 %457
    %v460 = vmul.f32 %v455, %v458
    %v461 = vmul.f32 %v442, %v417
    %v462 = vadd.f32 %v460, %v461
    %v463 = vpack.c.bf16 %v462, %v462
    %v464 = vld [vmem:[%s5] sm:$0xf]
    %v465 = vld [vmem:[%s5 + $0x4] sm:$0xf]
    %v466 = vld [vmem:[%s5 + $0x8] sm:$0xf]
    %v467 = vld [vmem:[%s5 + $0xc] sm:$0xf]
    %v468 = vld [vmem:[%s6] sm:$0x1]
    %v470 = vperm.slane %v468, 0
    %473 = vrot.lane.b32.xlu0 %v463, 96
    %v474 = vpop.permute.xlu0 %473
    %v479 = vunpack.c.l.b16 %v464
    %v480 = vunpack.c.l.b16 %v465
    %v481 = vunpack.c.l.b16 %v466
    %v482 = vunpack.c.l.b16 %v467
    %v483 = vpack.c.b16 %v480, %v479
    %v484 = vpack.c.b16 %v482, %v481
    %v488 = vsel %vm148, %v474, 0
    %490 = vmatpush.bf16.msra.mxu0 0
    %491 = vmatpush.bf16.msra.mxu0 0
    %492 = vmatpush.bf16.msra.mxu0 0
    %493 = vmatpush.bf16.msra.mxu0 0
    %494 = vmatpush.bf16.msra.mxu0 0
    %495 = vmatpush.bf16.msra.mxu0 0
    %496 = vmatpush.bf16.msra.mxu0 %v484
    %497 = vmatpush.bf16.msra.mxu0 %v483
    %498 = vmatmul.bf16.gmra.mxu0 %v488
    %v499 = vpop.f32.mrf.mxu0
    %v500 = vadd.f32 %v470, %v499
    %v501 = vpop.f32.mrf.mxu0
    %502 = vdwg.mxu0
    %503 = vst [vmem:[#allocation2] sm:$0xff] %v500
    // Predicated region
    $region30: #{tpu_custom_call.1} parent=1 // pred_check
      _
    $region31: #{tpu_custom_call.1} parent=1 // pred_check_branch
      %505 = sbr.rel (0) target = $region33
    $region32: #{tpu_custom_call.1} parent=1 // pred_region
      %507 = vsyncadd [#allocation3], 0
      %s509 = sshll.u32 [#allocation2], 4
      %s510 = int_to_ptr.vmem [resolvable:$true] %s509
      %s511 = sshll.u32 %s7, 4
      %s512 = int_to_ptr.hbm [resolvable:$true] %s511
      %514 = dma.vmem_to_hbm [thread:$0]  %s510, 128, %s512, [#allocation3]
    $region33: #{tpu_custom_call.1} parent=1 // pred_fallthru
      _
    // Predicated region
    $region34: #{tpu_custom_call.1} parent=1 // pred_check
      _
    $region35: #{tpu_custom_call.1} parent=1 // pred_check_branch
      %516 = sbr.rel (0) target = $region37
    $region36: #{tpu_custom_call.1} parent=1 // pred_region
      %518 = dma.done [#allocation3], 128
    $region37: #{tpu_custom_call.1} parent=1 // pred_fallthru
      _
    %519 = vsyncpa [#allocation3], 1

</llo_original>
